<compile_context>
chip_gen: v7x
topology: tpu7x:2x2x1
jax: 0.10.0
libtpu: 0.0.40
codegen_flags: <defaults>
</compile_context>

<pallas_src>
import functools

import jax
import jax.numpy as jnp
from jax.experimental import pallas as pl
from jax.experimental.pallas import tpu as pltpu


def _partial_out(psum):
    """Place a scalar partial sum at [0, 0] of an (8, 128) zero block."""
    r = jax.lax.broadcasted_iota(jnp.int32, (8, 128), 0)
    c = jax.lax.broadcasted_iota(jnp.int32, (8, 128), 1)
    return jnp.where((r == 0) & (c == 0), psum.astype(jnp.float32), 0.0)


def _soft_ce_kernel(logits_ref, target_ref, out_ref, *, true_b):
    x = logits_ref[...].astype(jnp.float32)      # [TB, C]
    t = target_ref[...].astype(jnp.float32)      # [TB, C]
    tb, c = x.shape

    # numerically stable log-softmax along the class (lane) axis
    m = jnp.max(x, axis=1, keepdims=True)
    s = x - m
    lse = jnp.log(jnp.sum(jnp.exp(s), axis=1, keepdims=True))
    logp = s - lse                                            # [TB, C]

    # mask rows of the (possibly padded) last tile against the true batch size
    row = pl.program_id(0) * tb + jax.lax.broadcasted_iota(jnp.int32, (tb, c), 0)
    contrib = jnp.where(row < true_b, -t * logp, 0.0)
    out_ref[...] = _partial_out(jnp.sum(contrib))


def _hard_ce_kernel(logits_ref, label_ref, out_ref, *, true_b):
    x = logits_ref[...].astype(jnp.float32)      # [TB, C]
    lbl = label_ref[...]                         # [TB, 1] int32
    tb, c = x.shape

    m = jnp.max(x, axis=1, keepdims=True)
    s = x - m
    lse = jnp.log(jnp.sum(jnp.exp(s), axis=1, keepdims=True))  # [TB, 1]

    col = jax.lax.broadcasted_iota(jnp.int32, (tb, c), 1)
    row = pl.program_id(0) * tb + jax.lax.broadcasted_iota(jnp.int32, (tb, c), 0)
    onehot = (col == lbl).astype(jnp.float32)                  # in-kernel one-hot
    # -log_softmax(x)[label] = lse - s[label]; gather via the one-hot mask,
    # and mask padded rows of the last tile.
    contrib = jnp.where(row < true_b, onehot * (lse - s), 0.0)
    out_ref[...] = _partial_out(jnp.sum(contrib))


def _choose_tile_rows(batch, classes, max_rows=None):
    # Keep per-input, per-pipeline-buffer VMEM footprint modest (~8 MiB in f32)
    # so the double-buffered pipeline fits comfortably even on v7x (64 MiB VMEM).
    budget_bytes = 8 * 1024 * 1024
    rows = budget_bytes // max(1, 4 * classes)
    rows = max(8, min(1024, (rows // 8) * 8))
    if max_rows is not None:
        rows = max(8, min(rows, max(8, (max_rows // 8) * 8)))
    if batch <= rows:
        return batch    # a single tile equal to the full batch dim is always legal
    return rows


def cutmix_cross_entropy_loss(logits, target, size_average=True,
                              max_rows_per_tile=None):
    """JAX/Pallas equivalent of CutMixCrossEntropyLoss.forward.

    logits: [B, C] float (f32 or bf16)
    target: [B] int labels OR [B, C] soft targets (f32 or bf16)
    returns: scalar float32 loss
    """
    B, C = logits.shape
    tb = _choose_tile_rows(B, C, max_rows_per_tile)
    num_tiles = pl.cdiv(B, tb)

    if target.ndim == 1:
        # hard labels: pass as a narrow [B, 1] int32 input; one-hot is built in-kernel
        second = target.astype(jnp.int32).reshape(B, 1)
        kernel = functools.partial(_hard_ce_kernel, true_b=B)
        second_spec = pl.BlockSpec((tb, 1), lambda i: (i, 0))
        second_bytes = B * 4
    else:
        # soft targets: keep native dtype (bf16 OK); cast to f32 inside the kernel
        second = target
        kernel = functools.partial(_soft_ce_kernel, true_b=B)
        second_spec = pl.BlockSpec((tb, C), lambda i: (i, 0))
        second_bytes = target.size * target.dtype.itemsize

    out_cols = num_tiles * 128
    cost = pl.CostEstimate(
        flops=6 * B * C,
        transcendentals=B * C,
        bytes_accessed=int(logits.size * logits.dtype.itemsize
                           + second_bytes + 8 * out_cols * 4),
    )

    partials = pl.pallas_call(
        kernel,
        out_shape=jax.ShapeDtypeStruct((8, out_cols), jnp.float32),
        grid=(num_tiles,),
        in_specs=[
            pl.BlockSpec((tb, C), lambda i: (i, 0)),
            second_spec,
        ],
        out_specs=pl.BlockSpec((8, 128), lambda i: (0, i)),
        compiler_params=pltpu.CompilerParams(
            dimension_semantics=("parallel",)),
        cost_estimate=cost,
    )(logits, second)

    # Every per-tile (8,128) block is zero except element [0,0] = its partial sum.
    total = jnp.sum(partials)
    if size_average:
        total = total / B     # divide by the TRUE batch size, not the tile size
    return total


def _ref_loss(logits, target, size_average=True):
    if target.ndim == 1:
        target = jax.nn.one_hot(target, num_classes=logits.shape[-1],
                                dtype=jnp.float32)
    logp = jax.nn.log_softmax(logits.astype(jnp.float32), axis=1)
    per = jnp.sum(-target.astype(jnp.float32) * logp, axis=1)
    return jnp.mean(per) if size_average else jnp.sum(per)


if __name__ == "__main__":
    key = jax.random.PRNGKey(0)
    k1, k2, k3, k4, k5 = jax.random.split(key, 5)

    B, C = 8, 32
    logits = jax.random.normal(k1, (B, C), dtype=jnp.float32)

    # 1) hard integer labels (in-kernel one-hot, no [B,C] one-hot DMA)
    labels = jax.random.randint(k2, (B,), 0, C)
    got = cutmix_cross_entropy_loss(logits, labels, size_average=True)
    jax.block_until_ready(got)
    want = _ref_loss(logits, labels, True)
    assert jnp.allclose(got, want, rtol=1e-5, atol=1e-5), (got, want)

    # 2) soft (CutMix-style) targets, f32
    soft = jax.nn.softmax(jax.random.normal(k3, (B, C), dtype=jnp.float32), axis=1)
    got = cutmix_cross_entropy_loss(logits, soft, size_average=True)
    jax.block_until_ready(got)
    want = _ref_loss(logits, soft, True)
    assert jnp.allclose(got, want, rtol=1e-5, atol=1e-5), (got, want)

    # 3) bf16 logits + bf16 soft targets (half the HBM bytes; math stays f32 in-kernel)
    got = cutmix_cross_entropy_loss(logits.astype(jnp.bfloat16),
                                    soft.astype(jnp.bfloat16), size_average=True)
    jax.block_until_ready(got)
    want = _ref_loss(logits.astype(jnp.bfloat16), soft.astype(jnp.bfloat16), True)
    assert jnp.allclose(got, want, rtol=1e-3, atol=1e-3), (got, want)

    # 4) multi-tile + padded last tile (B=20, 8-row tiles), hard labels, sum-reduction
    B2 = 20
    logits2 = jax.random.normal(k4, (B2, C), dtype=jnp.float32)
    labels2 = jax.random.randint(k5, (B2,), 0, C)
    got = cutmix_cross_entropy_loss(logits2, labels2, size_average=False,
                                    max_rows_per_tile=8)
    jax.block_until_ready(got)
    want = _ref_loss(logits2, labels2, False)
    assert jnp.allclose(got, want, rtol=1e-5, atol=1e-5), (got, want)

    # 5) multi-tile soft targets, mean (divides by the true B, not the tile size)
    soft2 = jax.nn.softmax(jax.random.normal(k3, (B2, C), dtype=jnp.float32), axis=1)
    got = cutmix_cross_entropy_loss(logits2, soft2, size_average=True,
                                    max_rows_per_tile=8)
    jax.block_until_ready(got)
    want = _ref_loss(logits2, soft2, True)
    assert jnp.allclose(got, want, rtol=1e-5, atol=1e-5), (got, want)

    print("KERNEL_OK")
</pallas_src>

<mosaic_0001>
module attributes {stable_mosaic.version = 11 : i64} {
  func.func @_hard_ce_kernel(%arg0: i32, %arg1: memref<8x32xf32, #tpu.memory_space<vmem>>, %arg2: memref<8x1xi32, #tpu.memory_space<vmem>>, %arg3: memref<8x128xf32, #tpu.memory_space<vmem>>) attributes {dimension_semantics = [#tpu.dimension_semantics<parallel>], iteration_bounds = array<i64: 1>, scalar_prefetch = 0 : i64, scratch_operands = 0 : i64, tpu.core_type = #tpu.core_type<tc>, window_params = [{transform_indices = @transform_0, window_bounds = array<i64: 8, 32>}, {transform_indices = @transform_1, window_bounds = array<i64: 8, 1>}, {transform_indices = @transform_2, window_bounds = array<i64: 8, 128>}]} {
    %c0 = arith.constant 0 : index
    %c0_0 = arith.constant 0 : index
    %0 = vector.load %arg1[%c0, %c0_0] : memref<8x32xf32, #tpu.memory_space<vmem>>, vector<8x32xf32>
    %c0_1 = arith.constant 0 : index
    %c0_2 = arith.constant 0 : index
    %1 = vector.load %arg2[%c0_1, %c0_2] : memref<8x1xi32, #tpu.memory_space<vmem>>, vector<8x1xi32>
    %cst = arith.constant dense<0xFF800000> : vector<8xf32>
    %2 = vector.multi_reduction <maximumf>, %0, %cst [1] : vector<8x32xf32> to vector<8xf32>
    %3 = vector.shape_cast %2 : vector<8xf32> to vector<8x1xf32>
    %4 = vector.broadcast %3 : vector<8x1xf32> to vector<8x32xf32>
    %5 = arith.subf %0, %4 : vector<8x32xf32>
    %6 = math.exp %5 : vector<8x32xf32>
    %cst_3 = arith.constant dense<0.000000e+00> : vector<8xf32>
    %7 = vector.multi_reduction <add>, %6, %cst_3 [1] : vector<8x32xf32> to vector<8xf32>
    %8 = vector.shape_cast %7 : vector<8xf32> to vector<8x1xf32>
    %9 = math.log %8 : vector<8x1xf32>
    %10 = tpu.iota {dimensions = array<i32: 1>} : vector<8x32xi32>
    %c8_i32 = arith.constant 8 : i32
    %11 = arith.muli %arg0, %c8_i32 : i32
    %12 = tpu.iota {dimensions = array<i32: 0>} : vector<8x32xi32>
    %13 = vector.broadcast %11 : i32 to vector<8x32xi32>
    %14 = arith.addi %13, %12 : vector<8x32xi32>
    %15 = vector.broadcast %1 : vector<8x1xi32> to vector<8x32xi32>
    %16 = arith.cmpi eq, %10, %15 : vector<8x32xi32>
    %17 = arith.extui %16 : vector<8x32xi1> to vector<8x32xi32>
    %18 = arith.sitofp %17 : vector<8x32xi32> to vector<8x32xf32>
    %c8_i32_4 = arith.constant 8 : i32
    %19 = vector.broadcast %c8_i32_4 : i32 to vector<8x32xi32>
    %20 = arith.cmpi slt, %14, %19 : vector<8x32xi32>
    %21 = vector.broadcast %9 : vector<8x1xf32> to vector<8x32xf32>
    %22 = arith.subf %21, %5 : vector<8x32xf32>
    %23 = arith.mulf %18, %22 : vector<8x32xf32>
    %cst_5 = arith.constant 0.000000e+00 : f32
    %24 = vector.broadcast %cst_5 : f32 to vector<8x32xf32>
    %25 = arith.select %20, %23, %24 : vector<8x32xi1>, vector<8x32xf32>
    %26 = vector.shape_cast %25 : vector<8x32xf32> to vector<1x8x32xf32>
    %cst_6 = arith.constant dense<0.000000e+00> : vector<1xf32>
    %27 = vector.multi_reduction <add>, %26, %cst_6 [1, 2] : vector<1x8x32xf32> to vector<1xf32>
    %28 = vector.shape_cast %27 : vector<1xf32> to vector<1x1x1xf32>
    %29 = vector.extract %28[0, 0, 0] : f32 from vector<1x1x1xf32>
    %30 = tpu.iota {dimensions = array<i32: 0>} : vector<8x128xi32>
    %31 = tpu.iota {dimensions = array<i32: 1>} : vector<8x128xi32>
    %c0_i32 = arith.constant 0 : i32
    %32 = vector.broadcast %c0_i32 : i32 to vector<8x128xi32>
    %33 = arith.cmpi eq, %30, %32 : vector<8x128xi32>
    %c0_i32_7 = arith.constant 0 : i32
    %34 = vector.broadcast %c0_i32_7 : i32 to vector<8x128xi32>
    %35 = arith.cmpi eq, %31, %34 : vector<8x128xi32>
    %36 = arith.andi %33, %35 : vector<8x128xi1>
    %cst_8 = arith.constant 0.000000e+00 : f32
    %37 = vector.broadcast %29 : f32 to vector<8x128xf32>
    %38 = vector.broadcast %cst_8 : f32 to vector<8x128xf32>
    %39 = arith.select %36, %37, %38 : vector<8x128xi1>, vector<8x128xf32>
    %c0_9 = arith.constant 0 : index
    %c0_10 = arith.constant 0 : index
    %40 = vector.load %arg3[%c0_9, %c0_10] : memref<8x128xf32, #tpu.memory_space<vmem>>, vector<8x128xf32>
    tpu.vector_store %arg3[%c0_9, %c0_10], %39 {strides = array<i32>} : memref<8x128xf32, #tpu.memory_space<vmem>>, vector<8x128xf32>,
    return
  }
  func.func @transform_0(%arg0: i32) -> (i32, i32) {
    %c0_i32 = arith.constant 0 : i32
    %c0_i32_0 = arith.constant 0 : i32
    return %arg0, %c0_i32 : i32, i32
  }
  func.func @transform_1(%arg0: i32) -> (i32, i32) {
    %c0_i32 = arith.constant 0 : i32
    %c0_i32_0 = arith.constant 0 : i32
    return %arg0, %c0_i32 : i32, i32
  }
  func.func @transform_2(%arg0: i32) -> (i32, i32) {
    %c0_i32 = arith.constant 0 : i32
    %c0_i32_0 = arith.constant 0 : i32
    return %c0_i32, %arg0 : i32, i32
  }
}

</mosaic_0001>

<llo_original>
// kernel: tpu_custom_call.1
$region0: #{tpu_custom_call.1}
  #allocation0 [shape = 'u32[]', space=smem, size = 0x4, offset = 0x4, fixed_abs, tag = 'smem constant byte address 0x4 - core index']
  #allocation1 [shape = 'u32[144,128]{1,0:T(1,128)}', space=vmem, size = 0x12000, scoped, tag = 'internal scratch']
  %s0 = inlined_call_operand.vmem [shape: f32[8,32], index: 0, kind: input, shape index: {}]
  %s1 = inlined_call_operand.vmem [shape: s32[8,1], index: 1, kind: input, shape index: {}]
  %s2 = inlined_call_operand.hbm [shape: f32[8,128], index: 2, kind: output, shape index: {}]
  %s3 = sld [smem:[#allocation0]]
  $region18: #{tpu_custom_call.1} parent=0
    _
  %s5 = ssub.s32 1, %s3
  %s6 = scalar_select 0, %s5, %s3
  $region1: #{tpu_custom_call.1} parent=0
    #allocation2 [shape = 'u8[4096]{0}', space=vmem, size = 0x1000, scoped, tag = 'output window, operand 0, single buffered']
    #allocation3 [shape = 's32[1]{0}', space=sflag, size = 0x4, scoped, tag = 'scoped memory for tpu_custom_call.1']
    %7 = vsyncpa [#allocation3], 0
    // Predicated region
    $region2: #{tpu_custom_call.1} parent=1 // pred_check
      _
    $region3: #{tpu_custom_call.1} parent=1 // pred_check_branch
      %9 = sbr.rel (0) target = $region5
    $region4: #{tpu_custom_call.1} parent=1 // pred_region
      _
    $region5: #{tpu_custom_call.1} parent=1 // pred_fallthru
      _
    // Predicated region
    $region6: #{tpu_custom_call.1} parent=1 // pred_check
      _
    $region7: #{tpu_custom_call.1} parent=1 // pred_check_branch
      %11 = sbr.rel (0) target = $region9
    $region8: #{tpu_custom_call.1} parent=1 // pred_region
      _
    $region9: #{tpu_custom_call.1} parent=1 // pred_fallthru
      _
    %v12 = vld [vmem:[%s0] sm:$0xff]
    %v13 = vld [vmem:[%s1] sm:$0xff]
    %vm14 = vcmask 261120
    %v15 = vsel %vm14, %v12, -inf
    %16 = vmax.xlane.f32.xlu0 %v15
    %v17 = vpop.xlane.xlu0 %16
    %v18 = vsub.f32 %v12, %v17
    %v19 = vmul.f32 %v18, 1.442695
    %v20 = vpow.pop %v19
    %v21 = vsel %vm14, %v20, 0.0
    %22 = vadd.xlane.f32.xlu0 %v21
    %v23 = vpop.xlane.xlu0 %22
    %v24 = vlog2.pop %v23
    %v25 = vmul.f32 %v24, 0.6931472
    %v26 = vlaneseq
    %v27 = vand.u32 %v26, 127
    %s28 = smul.u32 0, 8
    %v29 = vlaneseq
    %v30 = vshrl.u32 %v29, 7
    %v31 = vstv %s28
    %v32 = vadd.s32 %v31, %v30
    %33 = vset.pattern.permute.xlu0 0
    %34 = vperm.xlu0 %33, %v13
    %v35 = vpop.permute.xlu0 %34
    %vm36 = vcmp.eq.s32.totalorder %v27, %v35
    %v37 = vsel %vm36, 1, 0
    %v38 = vcvt.s32.f32 %v37
    %vm39 = vcmp.lt.s32.totalorder %v32, 8
    %v40 = vsub.f32 %v25, %v18
    %v41 = vmul.f32 %v38, %v40
    %v42 = vsel %vm39, %v41, 0.0
    %v43 = vsel %vm14, %v42, 0.0
    %44 = vadd.xlane.f32.xlu0 %v43
    %v45 = vpop.xlane.xlu0 %44
    %v46 = vrot.slane %v45, 4
    %v47 = vadd.f32 %v45, %v46
    %v48 = vrot.slane %v47, 2
    %v49 = vadd.f32 %v47, %v48
    %v50 = vrot.slane %v49, 1
    %v51 = vadd.f32 %v49, %v50
    %s52 = vtos %v51
    %vm53 = vcmp.eq.s32.totalorder %v30, 0
    %vm54 = vcmp.eq.s32.totalorder %v27, 0
    %vm55 = vmand %vm53, %vm54
    %v56 = vstv %s52
    %v57 = vsel %vm55, %v56, 0.0
    %58 = vst [vmem:[#allocation2] sm:$0xff] %v57
    // Predicated region
    $region10: #{tpu_custom_call.1} parent=1 // pred_check
      _
    $region11: #{tpu_custom_call.1} parent=1 // pred_check_branch
      %60 = sbr.rel (0) target = $region13
    $region12: #{tpu_custom_call.1} parent=1 // pred_region
      %s62 = ssub.s32 128, 128
      %63 = vsyncadd [#allocation3], %s62
      %s65 = sshll.u32 [#allocation2], 4
      %s66 = int_to_ptr.vmem [resolvable:$true] %s65
      %68 = dma.vmem_to_hbm [thread:$0]  %s66, 128, %s2, [#allocation3]
    $region13: #{tpu_custom_call.1} parent=1 // pred_fallthru
      _
    // Predicated region
    $region14: #{tpu_custom_call.1} parent=1 // pred_check
      _
    $region15: #{tpu_custom_call.1} parent=1 // pred_check_branch
      %70 = sbr.rel (0) target = $region17
    $region16: #{tpu_custom_call.1} parent=1 // pred_region
      %71 = dma.done [#allocation3], 128
    $region17: #{tpu_custom_call.1} parent=1 // pred_fallthru
      _
    %72 = vsyncpa [#allocation3], 1

</llo_original>
